<compile_context>
chip_gen: v7x
topology: tpu7x:2x2x1
jax: 0.10.0
libtpu: 0.0.40
codegen_flags: <defaults>
</compile_context>

<pallas_src>
import math
import jax
import jax.numpy as jnp
from jax.experimental import pallas as pl
from jax.experimental.pallas import tpu as pltpu

LANE = 128
SUBLANE = 8


def attention_kernel(c_ref, o_ref, w1_ref, w2_ref, out_ref):
    # cat([c, o], dim=1) -> one [TB, 2E] operand -> a single K=2E MXU push
    # (instead of two K=E pushes + a VALU add).
    x = jnp.concatenate([c_ref[...], o_ref[...]], axis=1)
    t1 = jnp.dot(x, w1_ref[...], preferred_element_type=jnp.float32)
    t2 = jnp.maximum(t1, 0.0)                                # ReLU (VPU)
    t3 = jnp.dot(t2, w2_ref[...], preferred_element_type=jnp.float32)
    out_ref[...] = t3.astype(out_ref.dtype)


def _round_up(x, m):
    return ((x + m - 1) // m) * m


def attention_forward(center_embed, offset_embed, atten_mats1, atten_mats2,
                      *, block_b=512):
    """Fused cat + mm + relu + mm.  center/offset: [B, E]; W1: [2E, M]; W2: [M, M]."""
    B, E = center_embed.shape
    M = atten_mats2.shape[1]
    dtype = center_embed.dtype

    # --- Lane-dense padding of the hidden/output dim (M -> multiple of 128).
    Mp = _round_up(M, LANE)
    if Mp != M:
        atten_mats1 = jnp.pad(atten_mats1, ((0, 0), (0, Mp - M)))
        atten_mats2 = jnp.pad(atten_mats2, ((0, Mp - M), (0, Mp - M)))

    # --- Batch tiling: TB rows per grid step, weights resident across steps.
    TB = min(block_b, _round_up(B, SUBLANE))
    TB = _round_up(TB, SUBLANE)
    Bp = _round_up(B, TB)
    if Bp != B:
        pad = ((0, Bp - B), (0, 0))
        center_embed = jnp.pad(center_embed, pad)
        offset_embed = jnp.pad(offset_embed, pad)

    grid = (Bp // TB,)

    cost = pl.CostEstimate(
        flops=2 * Bp * (2 * E * Mp + Mp * Mp),
        transcendentals=0,
        bytes_accessed=(2 * Bp * E + 2 * E * Mp + Mp * Mp + Bp * Mp)
        * jnp.dtype(dtype).itemsize,
    )

    out_p = pl.pallas_call(
        attention_kernel,
        out_shape=jax.ShapeDtypeStruct((Bp, Mp), dtype),
        grid=grid,
        in_specs=[
            pl.BlockSpec((TB, E), lambda i: (i, 0)),        # center tile
            pl.BlockSpec((TB, E), lambda i: (i, 0)),        # offset tile
            pl.BlockSpec((2 * E, Mp), lambda i: (0, 0)),    # W1 resident
            pl.BlockSpec((Mp, Mp), lambda i: (0, 0)),       # W2 resident
        ],
        out_specs=pl.BlockSpec((TB, Mp), lambda i: (i, 0)),
        compiler_params=pltpu.CompilerParams(
            dimension_semantics=("parallel",),               # megacore sharding
            vmem_limit_bytes=32 * 1024 * 1024,
        ),
        cost_estimate=cost,
    )(center_embed, offset_embed, atten_mats1, atten_mats2)

    # Slice off batch / lane padding outside the kernel.
    return out_p[:B, :M]


def xavier_uniform(key, shape, dtype=jnp.float32):
    # nn.init.xavier_uniform: U(-a, a), a = sqrt(6 / (fan_in + fan_out))
    fan_in, fan_out = shape[0], shape[1]
    a = math.sqrt(6.0 / (fan_in + fan_out))
    return jax.random.uniform(key, shape, dtype=dtype, minval=-a, maxval=a)


if __name__ == "__main__":
    key = jax.random.PRNGKey(0)
    k_c, k_o, k_w1, k_w2 = jax.random.split(key, 4)

    B = 200           # non-multiple of the tile to exercise batch padding
    expand_dims = 32  # E
    mode_dims = 32    # M

    center_embed = jax.random.normal(k_c, (B, expand_dims), dtype=jnp.float32)
    offset_embed = jax.random.normal(k_o, (B, expand_dims), dtype=jnp.float32)

    # Deterministic parameter init matching the module's __init__ shapes.
    # TODO(synk): ManifoldParameter only carries a manifold tag; numerically it
    # behaves as a plain FloatTensor in this forward, so plain arrays are used.
    atten_mats1 = xavier_uniform(k_w1, (expand_dims * 2, mode_dims))
    atten_mats2 = xavier_uniform(k_w2, (mode_dims, mode_dims))

    # block_b kept small here so the demo actually runs >1 grid step.
    out = attention_forward(center_embed, offset_embed, atten_mats1,
                            atten_mats2, block_b=128)
    out = jax.block_until_ready(out)

    # Pure-JAX reference for sanity.
    ref = jnp.maximum(
        jnp.concatenate([center_embed, offset_embed], axis=1) @ atten_mats1, 0.0
    ) @ atten_mats2
    assert out.shape == (B, mode_dims)
    assert jnp.allclose(out, ref, atol=1e-5, rtol=1e-5)

    print("KERNEL_OK")
</pallas_src>

<mosaic_0001>
module attributes {stable_mosaic.version = 11 : i64} {
  func.func @attention_kernel(%arg0: i32, %arg1: memref<128x32xf32, #tpu.memory_space<vmem>>, %arg2: memref<128x32xf32, #tpu.memory_space<vmem>>, %arg3: memref<64x128xf32, #tpu.memory_space<vmem>>, %arg4: memref<128x128xf32, #tpu.memory_space<vmem>>, %arg5: memref<128x128xf32, #tpu.memory_space<vmem>>) attributes {dimension_semantics = [#tpu.dimension_semantics<parallel>], iteration_bounds = array<i64: 2>, scalar_prefetch = 0 : i64, scratch_operands = 0 : i64, tpu.core_type = #tpu.core_type<tc>, window_params = [{transform_indices = @transform_0, window_bounds = array<i64: 128, 32>}, {transform_indices = @transform_1, window_bounds = array<i64: 128, 32>}, {pipeline_mode = #tpu.pipeline_mode<synchronous>, transform_indices = @transform_2, window_bounds = array<i64: 64, 128>}, {pipeline_mode = #tpu.pipeline_mode<synchronous>, transform_indices = @transform_3, window_bounds = array<i64: 128, 128>}, {transform_indices = @transform_4, window_bounds = array<i64: 128, 128>}]} {
    %c0 = arith.constant 0 : index
    %c0_0 = arith.constant 0 : index
    %0 = vector.load %arg1[%c0, %c0_0] : memref<128x32xf32, #tpu.memory_space<vmem>>, vector<128x32xf32>
    %c0_1 = arith.constant 0 : index
    %c0_2 = arith.constant 0 : index
    %1 = vector.load %arg2[%c0_1, %c0_2] : memref<128x32xf32, #tpu.memory_space<vmem>>, vector<128x32xf32>
    %2 = tpu.concatenate %0, %1 in 1 : vector<128x32xf32>, vector<128x32xf32> -> vector<128x64xf32>
    %c0_3 = arith.constant 0 : index
    %c0_4 = arith.constant 0 : index
    %3 = vector.load %arg3[%c0_3, %c0_4] : memref<64x128xf32, #tpu.memory_space<vmem>>, vector<64x128xf32>
    %cst = arith.constant dense<0.000000e+00> : vector<128x128xf32>
    %4 = tpu.matmul %2, %3, %cst {dimension_numbers = #tpu.dot_dimension_numbers<[1], [0], [0], [1], [0, 0, 1, 1], [], []>} : vector<128x64xf32>, vector<64x128xf32>, vector<128x128xf32> -> vector<128x128xf32>
    %cst_5 = arith.constant 0.000000e+00 : f32
    %5 = vector.broadcast %cst_5 : f32 to vector<128x128xf32>
    %6 = arith.maximumf %4, %5 : vector<128x128xf32>
    %c0_6 = arith.constant 0 : index
    %c0_7 = arith.constant 0 : index
    %7 = vector.load %arg4[%c0_6, %c0_7] : memref<128x128xf32, #tpu.memory_space<vmem>>, vector<128x128xf32>
    %cst_8 = arith.constant dense<0.000000e+00> : vector<128x128xf32>
    %8 = tpu.matmul %6, %7, %cst_8 {dimension_numbers = #tpu.dot_dimension_numbers<[1], [0], [0], [1], [0, 0, 1, 1], [], []>} : vector<128x128xf32>, vector<128x128xf32>, vector<128x128xf32> -> vector<128x128xf32>
    %c0_9 = arith.constant 0 : index
    %c0_10 = arith.constant 0 : index
    %9 = vector.load %arg5[%c0_9, %c0_10] : memref<128x128xf32, #tpu.memory_space<vmem>>, vector<128x128xf32>
    tpu.vector_store %arg5[%c0_9, %c0_10], %8 {strides = array<i32>} : memref<128x128xf32, #tpu.memory_space<vmem>>, vector<128x128xf32>,
    return
  }
  func.func @transform_0(%arg0: i32) -> (i32, i32) {
    %c0_i32 = arith.constant 0 : i32
    %c0_i32_0 = arith.constant 0 : i32
    return %arg0, %c0_i32 : i32, i32
  }
  func.func @transform_1(%arg0: i32) -> (i32, i32) {
    %c0_i32 = arith.constant 0 : i32
    %c0_i32_0 = arith.constant 0 : i32
    return %arg0, %c0_i32 : i32, i32
  }
  func.func @transform_2(%arg0: i32) -> (i32, i32) {
    %c0_i32 = arith.constant 0 : i32
    %c0_i32_0 = arith.constant 0 : i32
    %c0_i32_1 = arith.constant 0 : i32
    return %c0_i32, %c0_i32_0 : i32, i32
  }
  func.func @transform_3(%arg0: i32) -> (i32, i32) {
    %c0_i32 = arith.constant 0 : i32
    %c0_i32_0 = arith.constant 0 : i32
    %c0_i32_1 = arith.constant 0 : i32
    return %c0_i32, %c0_i32_0 : i32, i32
  }
  func.func @transform_4(%arg0: i32) -> (i32, i32) {
    %c0_i32 = arith.constant 0 : i32
    %c0_i32_0 = arith.constant 0 : i32
    return %arg0, %c0_i32 : i32, i32
  }
}

</mosaic_0001>

<llo_original>
// kernel: tpu_custom_call.1
$region0: #{tpu_custom_call.1}
  #allocation0 [shape = 'u32[]', space=smem, size = 0x4, offset = 0x4, fixed_abs, tag = 'smem constant byte address 0x4 - core index']
  #allocation1 [shape = 'u32[144,128]{1,0:T(1,128)}', space=vmem, size = 0x12000, scoped, tag = 'internal scratch']
  %s0 = inlined_call_operand.vmem [shape: f32[256,32], index: 0, kind: input, shape index: {}]
  %s1 = inlined_call_operand.vmem [shape: f32[256,32], index: 1, kind: input, shape index: {}]
  %s2 = inlined_call_operand.vmem [shape: f32[64,128], index: 2, kind: input, shape index: {}]
  %s3 = inlined_call_operand.vmem [shape: f32[128,128], index: 3, kind: input, shape index: {}]
  %s4 = inlined_call_operand.hbm [shape: f32[256,128], index: 4, kind: output, shape index: {}]
  %s5 = sld [smem:[#allocation0]]
  $region49: #{tpu_custom_call.1} parent=0
    _
  %s7 = ssub.s32 1, %s5
  %s8 = scalar_select 0, %s7, %s5
  $region1: #{tpu_custom_call.1} parent=0
    #allocation2 [shape = 'u8[131072]{0}', space=vmem, size = 0x20000, scoped, tag = 'output window, operand 0']
    #allocation3 [shape = 's32[2]{0}', space=sflag, size = 0x8, scoped, tag = 'scoped memory for tpu_custom_call.1']
    %9 = vsyncpa [#allocation3], 0
    %s10 = scalar_lea.sflag [#allocation3], 1
    %11 = vsyncpa %s10, 0
    loop: start=0, step=1, limit=4
    $region2: #{tpu_custom_call.1} parent=1 // loop_pre_header
      _
    $region3: #{tpu_custom_call.1} parent=1 // loop_header
      %s13 = sphi 0, %s17
      %p14 = scmp.ge.s32.totalorder %s13, 4
      %s23 = sphi 0, %s25
      %s26 = sphi 0, %s23
      %s27 = sphi 0, %s26
      %s43 = sphi 0, %s27
      %s49 = sphi 0, %s51
      %s52 = sphi 0, %s49
      %s53 = sphi 0, %s52
      %s69 = sphi 0, %s53
      %s73 = sphi 0, %s73
      %s75 = sphi 0, %s73
      %s76 = sphi 0, %s75
      %s90 = sphi 0, %s76
      %s94 = sphi 0, %s94
      %s96 = sphi 0, %s94
      %s97 = sphi 0, %s96
      %s111 = sphi 0, %s97
      %s117 = sphi 0, %s119
      %s120 = sphi 0, %s117
      %s121 = sphi 0, %s120
      %s137 = sphi 0, %s121
    $region4: #{tpu_custom_call.1} parent=1 // loop_header_branch
      %16 = sbr.rel (%p14) target = $region8
    $region5: #{tpu_custom_call.1} parent=1 // loop_body
      %s18 = ssub.s32 %s13, 1
      %s19 = ssub.s32 %s13, 2
      %s20 = sadd.s32 %s13, 1
      %s21 = ssub.s32 %s13, %s20
      %p22 = scmp.eq.s32.totalorder %s21, 0
      %s24 = sadd.s32 %s23, 1
      %s25 = scalar_select %p22, %s23, %s24
      %p28 = pneg %p22
      %p29 = scmp.eq.s32.totalorder %s13, 1
      %p30 = por %p28, %p29
      %p31 = scmp.ne.s32.totalorder %s23, %s26
      %p32 = scmp.eq.s32.totalorder %s13, 0
      %p33 = por %p31, %p32
      %p34 = scmp.ne.s32.totalorder %s23, %s26
      %p35 = scmp.eq.s32.totalorder %s18, 1
      %p36 = por %p34, %p35
      %p37 = scmp.ne.s32.totalorder %s26, %s27
      %p38 = scmp.eq.s32.totalorder %s18, 0
      %p39 = por %p37, %p38
      %p40 = scmp.ne.s32.totalorder %s26, %s27
      %p41 = scmp.eq.s32.totalorder %s19, 1
      %p42 = por %p40, %p41
      %p44 = scmp.ne.s32.totalorder %s27, %s43
      %p45 = scmp.eq.s32.totalorder %s19, 0
      %p46 = por %p44, %p45
      %s47 = ssub.s32 %s13, %s20
      %p48 = scmp.eq.s32.totalorder %s47, 0
      %s50 = sadd.s32 %s49, 1
      %s51 = scalar_select %p48, %s49, %s50
      %p54 = pneg %p48
      %p55 = scmp.eq.s32.totalorder %s13, 1
      %p56 = por %p54, %p55
      %p57 = scmp.ne.s32.totalorder %s49, %s52
      %p58 = scmp.eq.s32.totalorder %s13, 0
      %p59 = por %p57, %p58
      %p60 = scmp.ne.s32.totalorder %s49, %s52
      %p61 = scmp.eq.s32.totalorder %s18, 1
      %p62 = por %p60, %p61
      %p63 = scmp.ne.s32.totalorder %s52, %s53
      %p64 = scmp.eq.s32.totalorder %s18, 0
      %p65 = por %p63, %p64
      %p66 = scmp.ne.s32.totalorder %s52, %s53
      %p67 = scmp.eq.s32.totalorder %s19, 1
      %p68 = por %p66, %p67
      %p70 = scmp.ne.s32.totalorder %s53, %s69
      %p71 = scmp.eq.s32.totalorder %s19, 0
      %p72 = por %p70, %p71
      %s74 = sadd.s32 %s73, 1
      %p77 = scmp.eq.s32.totalorder %s13, 1
      %p78 = scmp.ne.s32.totalorder %s73, %s75
      %p79 = scmp.eq.s32.totalorder %s13, 0
      %p80 = por %p78, %p79
      %p81 = scmp.ne.s32.totalorder %s73, %s75
      %p82 = scmp.eq.s32.totalorder %s18, 1
      %p83 = por %p81, %p82
      %p84 = scmp.ne.s32.totalorder %s75, %s76
      %p85 = scmp.eq.s32.totalorder %s18, 0
      %p86 = por %p84, %p85
      %p87 = scmp.ne.s32.totalorder %s75, %s76
      %p88 = scmp.eq.s32.totalorder %s19, 1
      %p89 = por %p87, %p88
      %p91 = scmp.ne.s32.totalorder %s76, %s90
      %p92 = scmp.eq.s32.totalorder %s19, 0
      %p93 = por %p91, %p92
      %s95 = sadd.s32 %s94, 1
      %p98 = scmp.eq.s32.totalorder %s13, 1
      %p99 = scmp.ne.s32.totalorder %s94, %s96
      %p100 = scmp.eq.s32.totalorder %s13, 0
      %p101 = por %p99, %p100
      %p102 = scmp.ne.s32.totalorder %s94, %s96
      %p103 = scmp.eq.s32.totalorder %s18, 1
      %p104 = por %p102, %p103
      %p105 = scmp.ne.s32.totalorder %s96, %s97
      %p106 = scmp.eq.s32.totalorder %s18, 0
      %p107 = por %p105, %p106
      %p108 = scmp.ne.s32.totalorder %s96, %s97
      %p109 = scmp.eq.s32.totalorder %s19, 1
      %p110 = por %p108, %p109
      %p112 = scmp.ne.s32.totalorder %s97, %s111
      %p113 = scmp.eq.s32.totalorder %s19, 0
      %p114 = por %p112, %p113
      %s115 = ssub.s32 %s13, %s20
      %p116 = scmp.eq.s32.totalorder %s115, 0
      %s118 = sadd.s32 %s117, 1
      %s119 = scalar_select %p116, %s117, %s118
      %p122 = pneg %p116
      %p123 = scmp.eq.s32.totalorder %s13, 1
      %p124 = por %p122, %p123
      %p125 = scmp.ne.s32.totalorder %s117, %s120
      %p126 = scmp.eq.s32.totalorder %s13, 0
      %p127 = por %p125, %p126
      %p128 = scmp.ne.s32.totalorder %s117, %s120
      %p129 = scmp.eq.s32.totalorder %s18, 1
      %p130 = por %p128, %p129
      %p131 = scmp.ne.s32.totalorder %s120, %s121
      %p132 = scmp.eq.s32.totalorder %s18, 0
      %p133 = por %p131, %p132
      %p134 = scmp.ne.s32.totalorder %s120, %s121
      %p135 = scmp.eq.s32.totalorder %s19, 1
      %p136 = por %p134, %p135
      %p138 = scmp.ne.s32.totalorder %s121, %s137
      %p139 = scmp.eq.s32.totalorder %s19, 0
      %p140 = por %p138, %p139
      %p141 = scmp.le.s32.totalorder 1, %s13
      %p142 = scmp.lt.s32.totalorder %s13, 3
      %p143 = pnand %p141, %p142
      %p144 = pneg %p143
      // Predicated region
      $region9: #{tpu_custom_call.1} parent=5 // pred_check
        _
      $region10: #{tpu_custom_call.1} parent=5 // pred_check_branch
        %146 = sbr.rel (%p143) target = $region12
      $region11: #{tpu_custom_call.1} parent=5 // pred_region
        %s147 = ssub.s32 %s13, 1
        // Predicated region
        $region13: #{tpu_custom_call.1} parent=11 // pred_check
          %p148 = pneg %p86
        $region14: #{tpu_custom_call.1} parent=11 // pred_check_branch
          %150 = sbr.rel (%p148) target = $region16
        $region15: #{tpu_custom_call.1} parent=11 // pred_region
          _
        $region16: #{tpu_custom_call.1} parent=11 // pred_fallthru
          _
        // Predicated region
        $region17: #{tpu_custom_call.1} parent=11 // pred_check
          %p151 = pneg %p107
        $region18: #{tpu_custom_call.1} parent=11 // pred_check_branch
          %153 = sbr.rel (%p151) target = $region20
        $region19: #{tpu_custom_call.1} parent=11 // pred_region
          _
        $region20: #{tpu_custom_call.1} parent=11 // pred_fallthru
          _
      $region12: #{tpu_custom_call.1} parent=5 // pred_fallthru
        _
      %p154 = scmp.lt.s32.totalorder %s13, 2
      // Predicated region
      $region21: #{tpu_custom_call.1} parent=5 // pred_check
        %p155 = pneg %p154
      $region22: #{tpu_custom_call.1} parent=5 // pred_check_branch
        %157 = sbr.rel (%p155) target = $region24
      $region23: #{tpu_custom_call.1} parent=5 // pred_region
        // Predicated region
        $region25: #{tpu_custom_call.1} parent=23 // pred_check
          %p158 = pneg %p33
        $region26: #{tpu_custom_call.1} parent=23 // pred_check_branch
          %160 = sbr.rel (%p158) target = $region28
        $region27: #{tpu_custom_call.1} parent=23 // pred_region
          %s161 = smul.u32 16, %s13
          %p162 = scmp.lt.s32.totalorder %s161, 31
          %s163 = scalar_select %p162, %s161, 31
          %s164 = smul.addr %s163, 8
          %s165 = scalar_lea.vmem %s0, %s164
          %s166 = smul.u32 16, %s13
        $region28: #{tpu_custom_call.1} parent=23 // pred_fallthru
          _
        // Predicated region
        $region29: #{tpu_custom_call.1} parent=23 // pred_check
          %p167 = pneg %p59
        $region30: #{tpu_custom_call.1} parent=23 // pred_check_branch
          %169 = sbr.rel (%p167) target = $region32
        $region31: #{tpu_custom_call.1} parent=23 // pred_region
          %s170 = smul.u32 16, %s13
          %p171 = scmp.lt.s32.totalorder %s170, 31
          %s172 = scalar_select %p171, %s170, 31
          %s173 = smul.addr %s172, 8
          %s174 = scalar_lea.vmem %s1, %s173
          %s175 = smul.u32 16, %s13
        $region32: #{tpu_custom_call.1} parent=23 // pred_fallthru
          _
      $region24: #{tpu_custom_call.1} parent=5 // pred_fallthru
        _
      %p176 = scmp.le.s32.totalorder 1, %s13
      %p177 = scmp.lt.s32.totalorder %s13, 3
      %p178 = pnand %p176, %p177
      %p179 = pneg %p178
      // Predicated region
      $region33: #{tpu_custom_call.1} parent=5 // pred_check
        _
      $region34: #{tpu_custom_call.1} parent=5 // pred_check_branch
        %181 = sbr.rel (%p178) target = $region36
      $region35: #{tpu_custom_call.1} parent=5 // pred_region
        %s182 = ssub.s32 %s13, 1
        %s183 = smul.u32 16, %s18
        %p184 = scmp.lt.s32.totalorder %s183, 31
        %s185 = scalar_select %p184, %s183, 31
        %s186 = smul.addr %s185, 8
        %s187 = scalar_lea.vmem %s0, %s186
        %p188 = pneg %p39
        %p189 = pneg %p36
        %s190 = smul.u32 16, %s18
        %p191 = scmp.lt.s32.totalorder %s190, 31
        %s192 = scalar_select %p191, %s190, 31
        %s193 = smul.addr %s192, 8
        %s194 = scalar_lea.vmem %s1, %s193
        %p195 = pneg %p65
        %p196 = pneg %p62
        %p197 = pneg %p86
        %p198 = pneg %p83
        %p199 = pneg %p107
        %p200 = pneg %p104
        %p201 = pneg %p133
        %p202 = pneg %p130
        %s203 = sand.u32 %s120, 1
        %s204 = scalar_lea.sflag [#allocation3], %s203
        %s205 = sand.u32 %s120, 1
        %s206 = smul.addr %s205, 128
        %s207 = scalar_lea.vmem [#allocation2], %s206
        %s208 = smul.u32 16, %s18
        %p209 = scmp.lt.s32.totalorder %s208, 31
        %s210 = scalar_select %p209, %s208, 31
        %s211 = smul.addr %s210, 8
        %s212 = scalar_lea.vmem %s0, %s211
        %s213 = smul.u32 16, %s18
        %s214 = smul.u32 16, %s18
        %p215 = scmp.lt.s32.totalorder %s214, 31
        %s216 = scalar_select %p215, %s214, 31
        %s217 = smul.addr %s216, 8
        %s218 = scalar_lea.vmem %s1, %s217
        %s219 = smul.u32 16, %s18
        %s220 = smul.u32 16, %s18
        %v221 = vld [vmem:[%s212] sm:$0xff]
        %v222 = vld [vmem:[%s212 + $0x8] sm:$0xff]
        %v223 = vld [vmem:[%s212 + $0x10] sm:$0xff]
        %v224 = vld [vmem:[%s212 + $0x18] sm:$0xff]
        %v225 = vld [vmem:[%s212 + $0x20] sm:$0xff]
        %v226 = vld [vmem:[%s212 + $0x28] sm:$0xff]
        %v227 = vld [vmem:[%s212 + $0x30] sm:$0xff]
        %v228 = vld [vmem:[%s212 + $0x38] sm:$0xff]
        %v229 = vld [vmem:[%s212 + $0x40] sm:$0xff]
        %v230 = vld [vmem:[%s212 + $0x48] sm:$0xff]
        %v231 = vld [vmem:[%s212 + $0x50] sm:$0xff]
        %v232 = vld [vmem:[%s212 + $0x58] sm:$0xff]
        %v233 = vld [vmem:[%s212 + $0x60] sm:$0xff]
        %v234 = vld [vmem:[%s212 + $0x68] sm:$0xff]
        %v235 = vld [vmem:[%s212 + $0x70] sm:$0xff]
        %v236 = vld [vmem:[%s212 + $0x78] sm:$0xff]
        %v237 = vld [vmem:[%s218] sm:$0xff]
        %v238 = vld [vmem:[%s218 + $0x8] sm:$0xff]
        %v239 = vld [vmem:[%s218 + $0x10] sm:$0xff]
        %v240 = vld [vmem:[%s218 + $0x18] sm:$0xff]
        %v241 = vld [vmem:[%s218 + $0x20] sm:$0xff]
        %v242 = vld [vmem:[%s218 + $0x28] sm:$0xff]
        %v243 = vld [vmem:[%s218 + $0x30] sm:$0xff]
        %v244 = vld [vmem:[%s218 + $0x38] sm:$0xff]
        %v245 = vld [vmem:[%s218 + $0x40] sm:$0xff]
        %v246 = vld [vmem:[%s218 + $0x48] sm:$0xff]
        %v247 = vld [vmem:[%s218 + $0x50] sm:$0xff]
        %v248 = vld [vmem:[%s218 + $0x58] sm:$0xff]
        %v249 = vld [vmem:[%s218 + $0x60] sm:$0xff]
        %v250 = vld [vmem:[%s218 + $0x68] sm:$0xff]
        %v251 = vld [vmem:[%s218 + $0x70] sm:$0xff]
        %v252 = vld [vmem:[%s218 + $0x78] sm:$0xff]
        %269 = vrot.lane.b32.xlu0 %v237, 32
        %v270 = vpop.permute.xlu0 %269
        %271 = vrot.lane.b32.xlu0 %v238, 32
        %v272 = vpop.permute.xlu0 %271
        %273 = vrot.lane.b32.xlu0 %v239, 32
        %v274 = vpop.permute.xlu0 %273
        %275 = vrot.lane.b32.xlu0 %v240, 32
        %v276 = vpop.permute.xlu0 %275
        %277 = vrot.lane.b32.xlu0 %v241, 32
        %v278 = vpop.permute.xlu0 %277
        %279 = vrot.lane.b32.xlu0 %v242, 32
        %v280 = vpop.permute.xlu0 %279
        %281 = vrot.lane.b32.xlu0 %v243, 32
        %v282 = vpop.permute.xlu0 %281
        %283 = vrot.lane.b32.xlu0 %v244, 32
        %v284 = vpop.permute.xlu0 %283
        %285 = vrot.lane.b32.xlu0 %v245, 32
        %v286 = vpop.permute.xlu0 %285
        %287 = vrot.lane.b32.xlu0 %v246, 32
        %v288 = vpop.permute.xlu0 %287
        %289 = vrot.lane.b32.xlu0 %v247, 32
        %v290 = vpop.permute.xlu0 %289
        %291 = vrot.lane.b32.xlu0 %v248, 32
        %v292 = vpop.permute.xlu0 %291
        %293 = vrot.lane.b32.xlu0 %v249, 32
        %v294 = vpop.permute.xlu0 %293
        %295 = vrot.lane.b32.xlu0 %v250, 32
        %v296 = vpop.permute.xlu0 %295
        %297 = vrot.lane.b32.xlu0 %v251, 32
        %v298 = vpop.permute.xlu0 %297
        %299 = vrot.lane.b32.xlu0 %v252, 32
        %v300 = vpop.permute.xlu0 %299
        %vm317 = vcmask 261120
        %v318 = vsel %vm317, %v221, %v270
        %v319 = vsel %vm317, %v222, %v272
        %v320 = vsel %vm317, %v223, %v274
        %v321 = vsel %vm317, %v224, %v276
        %v322 = vsel %vm317, %v225, %v278
        %v323 = vsel %vm317, %v226, %v280
        %v324 = vsel %vm317, %v227, %v282
        %v325 = vsel %vm317, %v228, %v284
        %v326 = vsel %vm317, %v229, %v286
        %v327 = vsel %vm317, %v230, %v288
        %v328 = vsel %vm317, %v231, %v290
        %v329 = vsel %vm317, %v232, %v292
        %v330 = vsel %vm317, %v233, %v294
        %v331 = vsel %vm317, %v234, %v296
        %v332 = vsel %vm317, %v235, %v298
        %v333 = vsel %vm317, %v236, %v300
        %v334 = vld [vmem:[%s2] sm:$0xff]
        %v335 = vld [vmem:[%s2 + $0x8] sm:$0xff]
        %v336 = vld [vmem:[%s2 + $0x10] sm:$0xff]
        %v337 = vld [vmem:[%s2 + $0x18] sm:$0xff]
        %v338 = vld [vmem:[%s2 + $0x20] sm:$0xff]
        %v339 = vld [vmem:[%s2 + $0x28] sm:$0xff]
        %v340 = vld [vmem:[%s2 + $0x30] sm:$0xff]
        %v341 = vld [vmem:[%s2 + $0x38] sm:$0xff]
        %vm342 = vcmask 523264
        %v344 = vsel %vm342, %v318, 0
        %v347 = vsel %vm342, %v319, 0
        %v350 = vsel %vm342, %v320, 0
        %v353 = vsel %vm342, %v321, 0
        %v356 = vsel %vm342, %v322, 0
        %v359 = vsel %vm342, %v323, 0
        %v362 = vsel %vm342, %v324, 0
        %v365 = vsel %vm342, %v325, 0
        %v368 = vsel %vm342, %v326, 0
        %v371 = vsel %vm342, %v327, 0
        %v374 = vsel %vm342, %v328, 0
        %v377 = vsel %vm342, %v329, 0
        %v380 = vsel %vm342, %v330, 0
        %v383 = vsel %vm342, %v331, 0
        %v386 = vsel %vm342, %v332, 0
        %v389 = vsel %vm342, %v333, 0
        %391 = vmatprep.subr.mxu0 0.0
        %392 = vmatpush1.msra.mxu0 %v334
        %393 = vmatprep.subr.mxu0 0.0
        %394 = vmatpush1.msra.mxu0 %v335
        %395 = vmatprep.subr.mxu0 0.0
        %396 = vmatpush1.msra.mxu0 %v336
        %397 = vmatprep.subr.mxu0 0.0
        %398 = vmatpush1.msra.mxu0 %v337
        %399 = vmatprep.subr.mxu0 0.0
        %400 = vmatpush1.msra.mxu0 %v338
        %401 = vmatprep.subr.mxu0 0.0
        %402 = vmatpush1.msra.mxu0 %v339
        %403 = vmatprep.subr.mxu0 0.0
        %404 = vmatpush1.msra.mxu0 %v340
        %405 = vmatprep.subr.mxu0 0.0
        %406 = vmatpush1.msra.mxu0 %v341
        %407 = vmatprep.subr.mxu0 0.0
        %408 = vmatpush1.msra.mxu0 0.0
        %409 = vmatprep.subr.mxu0 0.0
        %410 = vmatpush1.msra.mxu0 0.0
        %411 = vmatprep.subr.mxu0 0.0
        %412 = vmatpush1.msra.mxu0 0.0
        %413 = vmatprep.subr.mxu0 0.0
        %414 = vmatpush1.msra.mxu0 0.0
        %415 = vmatprep.subr.mxu0 0.0
        %416 = vmatpush1.msra.mxu0 0.0
        %417 = vmatprep.subr.mxu0 0.0
        %418 = vmatpush1.msra.mxu0 0.0
        %419 = vmatprep.subr.mxu0 0.0
        %420 = vmatpush1.msra.mxu0 0.0
        %421 = vmatprep.subr.mxu0 0.0
        %422 = vmatpush1.msra.mxu0 0.0
        %423 = vmatprep.subr.mxu0 0.0
        %424 = vmatpush1.msra.mxu0 0.0
        %425 = vmatprep.subr.mxu0 0.0
        %426 = vmatpush1.msra.mxu0 0.0
        %427 = vmatprep.subr.mxu0 0.0
        %428 = vmatpush1.msra.mxu0 0.0
        %429 = vmatprep.subr.mxu0 0.0
        %430 = vmatpush1.msra.mxu0 0.0
        %431 = vmatprep.subr.mxu0 0.0
        %432 = vmatpush1.msra.mxu0 0.0
        %433 = vmatprep.subr.mxu0 0.0
        %434 = vmatpush1.msra.mxu0 0.0
        %435 = vmatprep.subr.mxu0 0.0
        %436 = vmatpush1.msra.mxu0 0.0
        %437 = vmatprep.subr.mxu0 0.0
        %438 = vmatpush1.msra.mxu0 0.0
        %439 = vmatprep.subr.mxu0 0.0
        %440 = vmatpush1.msra.mxu0 0.0
        %441 = vmatprep.subr.mxu0 0.0
        %442 = vmatpush1.msra.mxu0 0.0
        %443 = vmatprep.subr.mxu0 0.0
        %444 = vmatpush1.msra.mxu0 0.0
        %445 = vmatprep.subr.mxu0 0.0
        %446 = vmatpush1.msra.mxu0 0.0
        %447 = vmatprep.subr.mxu0 0.0
        %448 = vmatpush1.msra.mxu0 0.0
        %449 = vmatprep.subr.mxu0 0.0
        %450 = vmatpush1.msra.mxu0 0.0
        %451 = vmatprep.subr.mxu0 0.0
        %452 = vmatpush1.msra.mxu0 0.0
        %453 = vmatprep.subr.mxu0 0.0
        %454 = vmatpush1.msra.mxu0 0.0
        %455 = vmatprep.mubr.f32.mxu0 0.0
        %456 = vmatmul.mubr.f32.gmra.mrb[0].mxu0 %v344
        %v457 = vpop.f32.mrb[0].mxu0
        %v458 = vadd.f32 0.0, %v457
        %v459 = vpop.f32.mrb[0].mxu0
        %460 = vmatprep.mubr.f32.mxu0 0.0
        %461 = vmatmul.mubr.f32.gmra.mrb[0].mxu0 %v347
        %v462 = vpop.f32.mrb[0].mxu0
        %v463 = vadd.f32 0.0, %v462
        %v464 = vpop.f32.mrb[0].mxu0
        %465 = vmatprep.mubr.f32.mxu0 0.0
        %466 = vmatmul.mubr.f32.gmra.mrb[0].mxu0 %v350
        %v467 = vpop.f32.mrb[0].mxu0
        %v468 = vadd.f32 0.0, %v467
        %v469 = vpop.f32.mrb[0].mxu0
        %470 = vmatprep.mubr.f32.mxu0 0.0
        %471 = vmatmul.mubr.f32.gmra.mrb[0].mxu0 %v353
        %v472 = vpop.f32.mrb[0].mxu0
        %v473 = vadd.f32 0.0, %v472
        %v474 = vpop.f32.mrb[0].mxu0
        %475 = vmatprep.mubr.f32.mxu0 0.0
        %476 = vmatmul.mubr.f32.gmra.mrb[0].mxu0 %v356
        %v477 = vpop.f32.mrb[0].mxu0
        %v478 = vadd.f32 0.0, %v477
        %v479 = vpop.f32.mrb[0].mxu0
        %480 = vmatprep.mubr.f32.mxu0 0.0
        %481 = vmatmul.mubr.f32.gmra.mrb[0].mxu0 %v359
        %v482 = vpop.f32.mrb[0].mxu0
        %v483 = vadd.f32 0.0, %v482
        %v484 = vpop.f32.mrb[0].mxu0
        %485 = vmatprep.mubr.f32.mxu0 0.0
        %486 = vmatmul.mubr.f32.gmra.mrb[0].mxu0 %v362
        %v487 = vpop.f32.mrb[0].mxu0
        %v488 = vadd.f32 0.0, %v487
        %v489 = vpop.f32.mrb[0].mxu0
        %490 = vmatprep.mubr.f32.mxu0 0.0
        %491 = vmatmul.mubr.f32.gmra.mrb[0].mxu0 %v365
        %v492 = vpop.f32.mrb[0].mxu0
        %v493 = vadd.f32 0.0, %v492
        %v494 = vpop.f32.mrb[0].mxu0
        %495 = vmatprep.mubr.f32.mxu0 0.0
        %496 = vmatmul.mubr.f32.gmra.mrb[0].mxu0 %v368
        %v497 = vpop.f32.mrb[0].mxu0
        %v498 = vadd.f32 0.0, %v497
        %v499 = vpop.f32.mrb[0].mxu0
        %500 = vmatprep.mubr.f32.mxu0 0.0
        %501 = vmatmul.mubr.f32.gmra.mrb[0].mxu0 %v371
        %v502 = vpop.f32.mrb[0].mxu0
        %v503 = vadd.f32 0.0, %v502
        %v504 = vpop.f32.mrb[0].mxu0
        %505 = vmatprep.mubr.f32.mxu0 0.0
        %506 = vmatmul.mubr.f32.gmra.mrb[0].mxu0 %v374
        %v507 = vpop.f32.mrb[0].mxu0
        %v508 = vadd.f32 0.0, %v507
        %v509 = vpop.f32.mrb[0].mxu0
        %510 = vmatprep.mubr.f32.mxu0 0.0
        %511 = vmatmul.mubr.f32.gmra.mrb[0].mxu0 %v377
        %v512 = vpop.f32.mrb[0].mxu0
        %v513 = vadd.f32 0.0, %v512
        %v514 = vpop.f32.mrb[0].mxu0
        %515 = vmatprep.mubr.f32.mxu0 0.0
        %516 = vmatmul.mubr.f32.gmra.mrb[0].mxu0 %v380
        %v517 = vpop.f32.mrb[0].mxu0
        %v518 = vadd.f32 0.0, %v517
        %v519 = vpop.f32.mrb[0].mxu0
        %520 = vmatprep.mubr.f32.mxu0 0.0
        %521 = vmatmul.mubr.f32.gmra.mrb[0].mxu0 %v383
        %v522 = vpop.f32.mrb[0].mxu0
        %v523 = vadd.f32 0.0, %v522
        %v524 = vpop.f32.mrb[0].mxu0
        %525 = vmatprep.mubr.f32.mxu0 0.0
        %526 = vmatmul.mubr.f32.gmra.mrb[0].mxu0 %v386
        %v527 = vpop.f32.mrb[0].mxu0
        %v528 = vadd.f32 0.0, %v527
        %v529 = vpop.f32.mrb[0].mxu0
        %530 = vmatprep.mubr.f32.mxu0 0.0
        %531 = vmatmul.mubr.f32.gmra.mrb[0].mxu0 %v389
        %v532 = vpop.f32.mrb[0].mxu0
        %v533 = vadd.f32 0.0, %v532
        %v534 = vpop.f32.mrb[0].mxu0
        %535 = vdwg.mxu0
        %v536 = vmax.f32 %v458, 0.0
        %v537 = vmax.f32 %v463, 0.0
        %v538 = vmax.f32 %v468, 0.0
        %v539 = vmax.f32 %v473, 0.0
        %v540 = vmax.f32 %v478, 0.0
        %v541 = vmax.f32 %v483, 0.0
        %v542 = vmax.f32 %v488, 0.0
        %v543 = vmax.f32 %v493, 0.0
        %v544 = vmax.f32 %v498, 0.0
        %v545 = vmax.f32 %v503, 0.0
        %v546 = vmax.f32 %v508, 0.0
        %v547 = vmax.f32 %v513, 0.0
        %v548 = vmax.f32 %v518, 0.0
        %v549 = vmax.f32 %v523, 0.0
        %v550 = vmax.f32 %v528, 0.0
        %v551 = vmax.f32 %v533, 0.0
        %v552 = vld [vmem:[%s3] sm:$0xff]
        %v553 = vld [vmem:[%s3 + $0x8] sm:$0xff]
        %v554 = vld [vmem:[%s3 + $0x10] sm:$0xff]
        %v555 = vld [vmem:[%s3 + $0x18] sm:$0xff]
        %v556 = vld [vmem:[%s3 + $0x20] sm:$0xff]
        %v557 = vld [vmem:[%s3 + $0x28] sm:$0xff]
        %v558 = vld [vmem:[%s3 + $0x30] sm:$0xff]
        %v559 = vld [vmem:[%s3 + $0x38] sm:$0xff]
        %v560 = vld [vmem:[%s3 + $0x40] sm:$0xff]
        %v561 = vld [vmem:[%s3 + $0x48] sm:$0xff]
        %v562 = vld [vmem:[%s3 + $0x50] sm:$0xff]
        %v563 = vld [vmem:[%s3 + $0x58] sm:$0xff]
        %v564 = vld [vmem:[%s3 + $0x60] sm:$0xff]
        %v565 = vld [vmem:[%s3 + $0x68] sm:$0xff]
        %v566 = vld [vmem:[%s3 + $0x70] sm:$0xff]
        %v567 = vld [vmem:[%s3 + $0x78] sm:$0xff]
        %568 = vmatprep.subr.mxu0 0.0
        %569 = vmatpush1.msra.mxu0 %v552
        %570 = vmatprep.subr.mxu0 0.0
        %571 = vmatpush1.msra.mxu0 %v553
        %572 = vmatprep.subr.mxu0 0.0
        %573 = vmatpush1.msra.mxu0 %v554
        %574 = vmatprep.subr.mxu0 0.0
        %575 = vmatpush1.msra.mxu0 %v555
        %576 = vmatprep.subr.mxu0 0.0
        %577 = vmatpush1.msra.mxu0 %v556
        %578 = vmatprep.subr.mxu0 0.0
        %579 = vmatpush1.msra.mxu0 %v557
        %580 = vmatprep.subr.mxu0 0.0
        %581 = vmatpush1.msra.mxu0 %v558
        %582 = vmatprep.subr.mxu0 0.0
        %583 = vmatpush1.msra.mxu0 %v559
        %584 = vmatprep.subr.mxu0 0.0
        %585 = vmatpush1.msra.mxu0 %v560
        %586 = vmatprep.subr.mxu0 0.0
        %587 = vmatpush1.msra.mxu0 %v561
        %588 = vmatprep.subr.mxu0 0.0
        %589 = vmatpush1.msra.mxu0 %v562
        %590 = vmatprep.subr.mxu0 0.0
        %591 = vmatpush1.msra.mxu0 %v563
        %592 = vmatprep.subr.mxu0 0.0
        %593 = vmatpush1.msra.mxu0 %v564
        %594 = vmatprep.subr.mxu0 0.0
        %595 = vmatpush1.msra.mxu0 %v565
        %596 = vmatprep.subr.mxu0 0.0
        %597 = vmatpush1.msra.mxu0 %v566
        %598 = vmatprep.subr.mxu0 0.0
        %599 = vmatpush1.msra.mxu0 %v567
        %600 = vmatprep.subr.mxu0 0.0
        %601 = vmatpush1.msra.mxu0 0.0
        %602 = vmatprep.subr.mxu0 0.0
        %603 = vmatpush1.msra.mxu0 0.0
        %604 = vmatprep.subr.mxu0 0.0
        %605 = vmatpush1.msra.mxu0 0.0
        %606 = vmatprep.subr.mxu0 0.0
        %607 = vmatpush1.msra.mxu0 0.0
        %608 = vmatprep.subr.mxu0 0.0
        %609 = vmatpush1.msra.mxu0 0.0
        %610 = vmatprep.subr.mxu0 0.0
        %611 = vmatpush1.msra.mxu0 0.0
        %612 = vmatprep.subr.mxu0 0.0
        %613 = vmatpush1.msra.mxu0 0.0
        %614 = vmatprep.subr.mxu0 0.0
        %615 = vmatpush1.msra.mxu0 0.0
        %616 = vmatprep.subr.mxu0 0.0
        %617 = vmatpush1.msra.mxu0 0.0
        %618 = vmatprep.subr.mxu0 0.0
        %619 = vmatpush1.msra.mxu0 0.0
        %620 = vmatprep.subr.mxu0 0.0
        %621 = vmatpush1.msra.mxu0 0.0
        %622 = vmatprep.subr.mxu0 0.0
        %623 = vmatpush1.msra.mxu0 0.0
        %624 = vmatprep.subr.mxu0 0.0
        %625 = vmatpush1.msra.mxu0 0.0
        %626 = vmatprep.subr.mxu0 0.0
        %627 = vmatpush1.msra.mxu0 0.0
        %628 = vmatprep.subr.mxu0 0.0
        %629 = vmatpush1.msra.mxu0 0.0
        %630 = vmatprep.subr.mxu0 0.0
        %631 = vmatpush1.msra.mxu0 0.0
        %632 = vmatprep.mubr.f32.mxu0 0.0
        %633 = vmatmul.mubr.f32.gmra.mrb[0].mxu0 %v536
        %v634 = vpop.f32.mrb[0].mxu0
        %v635 = vadd.f32 0.0, %v634
        %v636 = vpop.f32.mrb[0].mxu0
        %637 = vmatprep.mubr.f32.mxu0 0.0
        %638 = vmatmul.mubr.f32.gmra.mrb[0].mxu0 %v537
        %v639 = vpop.f32.mrb[0].mxu0
        %v640 = vadd.f32 0.0, %v639
        %v641 = vpop.f32.mrb[0].mxu0
        %642 = vmatprep.mubr.f32.mxu0 0.0
        %643 = vmatmul.mubr.f32.gmra.mrb[0].mxu0 %v538
        %v644 = vpop.f32.mrb[0].mxu0
        %v645 = vadd.f32 0.0, %v644
        %v646 = vpop.f32.mrb[0].mxu0
        %647 = vmatprep.mubr.f32.mxu0 0.0
        %648 = vmatmul.mubr.f32.gmra.mrb[0].mxu0 %v539
        %v649 = vpop.f32.mrb[0].mxu0
        %v650 = vadd.f32 0.0, %v649
        %v651 = vpop.f32.mrb[0].mxu0
        %652 = vmatprep.mubr.f32.mxu0 0.0
        %653 = vmatmul.mubr.f32.gmra.mrb[0].mxu0 %v540
        %v654 = vpop.f32.mrb[0].mxu0
        %v655 = vadd.f32 0.0, %v654
        %v656 = vpop.f32.mrb[0].mxu0
        %657 = vmatprep.mubr.f32.mxu0 0.0
        %658 = vmatmul.mubr.f32.gmra.mrb[0].mxu0 %v541
        %v659 = vpop.f32.mrb[0].mxu0
        %v660 = vadd.f32 0.0, %v659
        %v661 = vpop.f32.mrb[0].mxu0
        %662 = vmatprep.mubr.f32.mxu0 0.0
        %663 = vmatmul.mubr.f32.gmra.mrb[0].mxu0 %v542
        %v664 = vpop.f32.mrb[0].mxu0
        %v665 = vadd.f32 0.0, %v664
        %v666 = vpop.f32.mrb[0].mxu0
        %667 = vmatprep.mubr.f32.mxu0 0.0
        %668 = vmatmul.mubr.f32.gmra.mrb[0].mxu0 %v543
        %v669 = vpop.f32.mrb[0].mxu0
        %v670 = vadd.f32 0.0, %v669
        %v671 = vpop.f32.mrb[0].mxu0
        %672 = vmatprep.mubr.f32.mxu0 0.0
        %673 = vmatmul.mubr.f32.gmra.mrb[0].mxu0 %v544
        %v674 = vpop.f32.mrb[0].mxu0
        %v675 = vadd.f32 0.0, %v674
        %v676 = vpop.f32.mrb[0].mxu0
        %677 = vmatprep.mubr.f32.mxu0 0.0
        %678 = vmatmul.mubr.f32.gmra.mrb[0].mxu0 %v545
        %v679 = vpop.f32.mrb[0].mxu0
        %v680 = vadd.f32 0.0, %v679
        %v681 = vpop.f32.mrb[0].mxu0
        %682 = vmatprep.mubr.f32.mxu0 0.0
        %683 = vmatmul.mubr.f32.gmra.mrb[0].mxu0 %v546
        %v684 = vpop.f32.mrb[0].mxu0
        %v685 = vadd.f32 0.0, %v684
        %v686 = vpop.f32.mrb[0].mxu0
        %687 = vmatprep.mubr.f32.mxu0 0.0
        %688 = vmatmul.mubr.f32.gmra.mrb[0].mxu0 %v547
        %v689 = vpop.f32.mrb[0].mxu0
        %v690 = vadd.f32 0.0, %v689
        %v691 = vpop.f32.mrb[0].mxu0
        %692 = vmatprep.mubr.f32.mxu0 0.0
        %693 = vmatmul.mubr.f32.gmra.mrb[0].mxu0 %v548
        %v694 = vpop.f32.mrb[0].mxu0
        %v695 = vadd.f32 0.0, %v694
        %v696 = vpop.f32.mrb[0].mxu0
        %697 = vmatprep.mubr.f32.mxu0 0.0
        %698 = vmatmul.mubr.f32.gmra.mrb[0].mxu0 %v549
        %v699 = vpop.f32.mrb[0].mxu0
        %v700 = vadd.f32 0.0, %v699
        %v701 = vpop.f32.mrb[0].mxu0
        %702 = vmatprep.mubr.f32.mxu0 0.0
        %703 = vmatmul.mubr.f32.gmra.mrb[0].mxu0 %v550
        %v704 = vpop.f32.mrb[0].mxu0
        %v705 = vadd.f32 0.0, %v704
        %v706 = vpop.f32.mrb[0].mxu0
        %707 = vmatprep.mubr.f32.mxu0 0.0
        %708 = vmatmul.mubr.f32.gmra.mrb[0].mxu0 %v551
        %v709 = vpop.f32.mrb[0].mxu0
        %v710 = vadd.f32 0.0, %v709
        %v711 = vpop.f32.mrb[0].mxu0
        %712 = vdwg.mxu0
        %713 = vst [vmem:[%s207] sm:$0xff] %v635
        %714 = vst [vmem:[%s207 + $0x8] sm:$0xff] %v640
        %715 = vst [vmem:[%s207 + $0x10] sm:$0xff] %v645
        %716 = vst [vmem:[%s207 + $0x18] sm:$0xff] %v650
        %717 = vst [vmem:[%s207 + $0x20] sm:$0xff] %v655
        %718 = vst [vmem:[%s207 + $0x28] sm:$0xff] %v660
        %719 = vst [vmem:[%s207 + $0x30] sm:$0xff] %v665
        %720 = vst [vmem:[%s207 + $0x38] sm:$0xff] %v670
        %721 = vst [vmem:[%s207 + $0x40] sm:$0xff] %v675
        %722 = vst [vmem:[%s207 + $0x48] sm:$0xff] %v680
        %723 = vst [vmem:[%s207 + $0x50] sm:$0xff] %v685
        %724 = vst [vmem:[%s207 + $0x58] sm:$0xff] %v690
        %725 = vst [vmem:[%s207 + $0x60] sm:$0xff] %v695
        %726 = vst [vmem:[%s207 + $0x68] sm:$0xff] %v700
        %727 = vst [vmem:[%s207 + $0x70] sm:$0xff] %v705
        %728 = vst [vmem:[%s207 + $0x78] sm:$0xff] %v710
        %s729 = sand.u32 %s120, 1
        %s730 = scalar_lea.sflag [#allocation3], %s729
        %s731 = sand.u32 %s120, 1
        %s732 = smul.addr %s731, 128
        %s733 = scalar_lea.vmem [#allocation2], %s732
        // Predicated region
        $region37: #{tpu_custom_call.1} parent=35 // pred_check
          %p734 = pneg %p130
        $region38: #{tpu_custom_call.1} parent=35 // pred_check_branch
          %736 = sbr.rel (%p734) target = $region40
        $region39: #{tpu_custom_call.1} parent=35 // pred_region
          %s737 = smul.u32 16, %s18
          %s739 = ssub.s32 2048, 2048
          %740 = vsyncadd %s730, %s739
          %s741 = smul.addr %s737, 128
          %s742 = scalar_lea.hbm %s4, %s741
          %s743 = sshll.u32 %s733, 4
          %s744 = int_to_ptr.vmem [resolvable:$true] %s743
          %749 = dma.vmem_to_hbm [thread:$0]  %s744, 2048, %s742, %s730, 128, 128, 8
        $region40: #{tpu_custom_call.1} parent=35 // pred_fallthru
          _
      $region36: #{tpu_custom_call.1} parent=5 // pred_fallthru
        _
      %p750 = scmp.le.s32.totalorder 2, %s13
      // Predicated region
      $region41: #{tpu_custom_call.1} parent=5 // pred_check
        %p751 = pneg %p750
      $region42: #{tpu_custom_call.1} parent=5 // pred_check_branch
        %753 = sbr.rel (%p751) target = $region44
      $region43: #{tpu_custom_call.1} parent=5 // pred_region
        %s754 = ssub.s32 %s13, 2
        // Predicated region
        $region45: #{tpu_custom_call.1} parent=43 // pred_check
          %p755 = pneg %p136
        $region46: #{tpu_custom_call.1} parent=43 // pred_check_branch
          %757 = sbr.rel (%p755) target = $region48
        $region47: #{tpu_custom_call.1} parent=43 // pred_region
          %s758 = sand.u32 %s121, 1
          %s759 = scalar_lea.sflag [#allocation3], %s758
          %s760 = sand.u32 %s121, 1
          %s761 = smul.addr %s760, 128
          %s762 = scalar_lea.vmem [#allocation2], %s761
          %763 = dma.done %s759, 2048
        $region48: #{tpu_custom_call.1} parent=43 // pred_fallthru
          _
      $region44: #{tpu_custom_call.1} parent=5 // pred_fallthru
        _
    $region6: #{tpu_custom_call.1} parent=1 // loop_footer
      %s17 = sadd.s32 1, %s13
    $region7: #{tpu_custom_call.1} parent=1 // loop_footer_branch
      %12 = sbr.rel target = $region3
    $region8: #{tpu_custom_call.1} parent=1 // loop_exit
      _
    %764 = vsyncpa [#allocation3], 1
    %s765 = scalar_lea.sflag [#allocation3], 1
    %766 = vsyncpa %s765, 1

</llo_original>
